<compile_context>
chip_gen: v5e
topology: v5e:2x2
jax: 0.10.0
libtpu: 0.0.40
codegen_flags: <defaults>
</compile_context>

<pallas_src>
import math

import jax
import jax.numpy as jnp
from jax.experimental import pallas as pl
from jax.experimental.pallas import tpu as pltpu

INIT = 0.01


def _round_up(x, m):
    return (x + m - 1) // m * m


def _sublane_granule(dtype):
    # Minimum sublane tile per dtype: f32 -> 8, bf16 -> 16, int8/fp8 -> 32.
    return max(8, 32 // jnp.dtype(dtype).itemsize)


def _as_dtype(x, dt):
    return x if x.dtype == dt else x.astype(dt)


def _auto_vmem_budget():
    """Returns (residency budget we account for, compiler vmem limit) in bytes."""
    try:
        cap = int(pltpu.get_tpu_info().vmem_capacity_bytes)
    except Exception:
        cap = 0
    if cap <= 0:
        cap = 64 * 1024 * 1024  # conservative default: v7x has 64 MiB / TensorCore
    limit = min(cap * 3 // 4, 96 * 1024 * 1024)  # v5e/v6e -> 96 MiB, v7x -> 48 MiB
    budget = limit * 3 // 5                       # headroom for compiler temporaries
    return budget, limit


def _copy_linear_kernel(b_ref, c_ref, s_ref, i_ref, vc_ref, vs_ref, vi_ref,
                        out_ref):
    # Three MXU matmuls (mat-vec or block-diagonal packed form) with f32
    # accumulation, summed, plus a scalar bias from SMEM.
    acc = jnp.dot(c_ref[...], vc_ref[...], preferred_element_type=jnp.float32)
    acc = acc + jnp.dot(s_ref[...], vs_ref[...],
                        preferred_element_type=jnp.float32)
    acc = acc + jnp.dot(i_ref[...], vi_ref[...],
                        preferred_element_type=jnp.float32)
    out_ref[...] = (acc + b_ref[0]).astype(out_ref.dtype)


def copy_linear(context, state, input_, v_c, v_s, v_i, b=None, *,
                max_step_in_bytes=8 * 1024 * 1024,
                vmem_budget_bytes=None, vmem_limit_bytes=None,
                _force_tile_rows=None):
    """context: (B,S,Dc), state: (B,S,Ds), input_: (B,S,Di) -> (B,S,1)."""
    B, S, Dc = context.shape
    Ds = state.shape[-1]
    Di = input_.shape[-1]
    dims = (Dc, Ds, Di)
    N = B * S
    d_total = Dc + Ds + Di

    act_dtype = context.dtype
    itemsize = jnp.dtype(act_dtype).itemsize
    gran = _sublane_granule(act_dtype)

    auto_budget, auto_limit = _auto_vmem_budget()
    budget = auto_budget if vmem_budget_bytes is None else int(vmem_budget_bytes)
    limit = auto_limit if vmem_limit_bytes is None else int(vmem_limit_bytes)

    xs = [context.reshape(N, Dc),
          _as_dtype(state.reshape(N, Ds), act_dtype),
          _as_dtype(input_.reshape(N, Di), act_dtype)]
    vecs = [v_c, v_s, v_i]

    # ------------------------------------------------------------------ layout
    # Packed layout: fold g consecutive rows into one lane-dense row of width
    # g*D (free reshape) and use a block-diagonal (g*D, g) weight so the dot
    # emits one output per original row, g lanes wide.
    g = 1
    for D in dims:
        g = max(g, 128 // math.gcd(D, 128))
    packed_weight_bytes = 2 * sum(g * D * 128 for D in dims) * itemsize
    use_packed = (2 <= g <= 32) and (N % g == 0) and \
                 (packed_weight_bytes <= 4 * 1024 * 1024)

    if use_packed:
        rows = N // g
        xs = [x.reshape(rows, g * D) for x, D in zip(xs, dims)]
        # Block-diagonal weight: W[k*D + d, k] = v[d].
        ws = [jnp.kron(jnp.eye(g, dtype=act_dtype),
                       _as_dtype(v, act_dtype).reshape(D, 1))
              for v, D in zip(vecs, dims)]
        out_cols = g
        in_row_vmem = g * d_total * itemsize           # lane-dense, no padding
        out_row_vmem = 128 * itemsize                  # (tile, g) pads g -> 128 lanes
        weight_bytes = packed_weight_bytes
        hbm_in_row = g * d_total * itemsize            # real HBM bytes / block row
    else:
        rows = N
        ws = [_as_dtype(v, act_dtype).reshape(D, 1) for v, D in zip(vecs, dims)]
        out_cols = 1
        in_row_vmem = sum(_round_up(D, 128) for D in dims) * itemsize
        out_row_vmem = 128 * itemsize                  # (tile, 1) pads 1 -> 128 lanes
        weight_bytes = 2 * sum(_round_up(D, 8) * 128 for D in dims) * itemsize
        hbm_in_row = d_total * itemsize

    # ------------------------------------------------------------------ tiling
    per_row = 2 * (in_row_vmem + out_row_vmem)         # x2: double-buffered blocks
    avail = max(budget - weight_bytes - 64 * 1024, per_row * gran)
    tile = avail // per_row
    tile = min(tile, max(gran, max_step_in_bytes // max(hbm_in_row, 1)))
    tile = max(gran, (tile // gran) * gran)
    if tile >= rows:
        if rows >= 2 * gran:
            # Keep >= 2 grid steps so ("parallel",) can shard across TensorCores.
            tile = _round_up((rows + 1) // 2, gran)
        else:
            tile = rows        # single block with exact (full-array) dims
    if _force_tile_rows is not None:                   # test-only override
        tile = int(_force_tile_rows)
    grid = (-(-rows // tile),)                          # cdiv; ragged last block OK

    # ------------------------------------------------------------------ specs
    if b is None:
        b_arr = jnp.zeros((1,), jnp.float32)
    else:
        b_arr = jnp.asarray(b, jnp.float32).reshape(1)

    bias_spec = pl.BlockSpec(memory_space=pltpu.SMEM)
    act_specs = [pl.BlockSpec((tile, x.shape[1]), lambda i: (i, 0)) for x in xs]
    w_specs = [pl.BlockSpec(w.shape, lambda i: (0, 0)) for w in ws]
    out_spec = pl.BlockSpec((tile, out_cols), lambda i: (i, 0))

    flops = sum(2 * rows * x.shape[1] * out_cols for x in xs)
    bytes_accessed = (N * d_total * itemsize + rows * out_cols * itemsize
                      + sum(int(w.size) * itemsize for w in ws) + 4)

    out = pl.pallas_call(
        _copy_linear_kernel,
        out_shape=jax.ShapeDtypeStruct((rows, out_cols), act_dtype),
        grid_spec=pltpu.PrefetchScalarGridSpec(
            num_scalar_prefetch=0,
            grid=grid,
            in_specs=[bias_spec, *act_specs, *w_specs],
            out_specs=out_spec,
        ),
        compiler_params=pltpu.CompilerParams(
            dimension_semantics=("parallel",),
            vmem_limit_bytes=int(limit),
        ),
        cost_estimate=pl.CostEstimate(flops=int(flops), transcendentals=0,
                                      bytes_accessed=int(bytes_accessed)),
    )(b_arr, *xs, *ws)

    return out.reshape(B, S, 1)


def _reference(context, state, input_, v_c, v_s, v_i, b):
    out = (context @ v_c[:, None]) + (state @ v_s[:, None]) + (input_ @ v_i[:, None])
    if b is not None:
        out = out + jnp.asarray(b, jnp.float32).reshape(1)[None, :]
    return out


if __name__ == "__main__":
    key = jax.random.PRNGKey(0)
    context_dim, state_dim, input_dim = 32, 64, 32

    k1, k2, k3 = jax.random.split(key, 3)
    # Deterministic parameter init mirroring init.uniform_(-INIT, INIT).
    v_c = jax.random.uniform(k1, (context_dim,), jnp.float32, -INIT, INIT)
    v_s = jax.random.uniform(k2, (state_dim,), jnp.float32, -INIT, INIT)
    v_i = jax.random.uniform(k3, (input_dim,), jnp.float32, -INIT, INIT)
    b = jnp.zeros((1,), jnp.float32)   # bias=True branch

    # Cases exercise: packed lane-dense path (N % g == 0), the plain fallback
    # with a single exact-shaped block (N % g != 0), a multi-step packed grid
    # with a ragged last block, and a multi-step fallback grid with a ragged
    # last block.  (_force_tile_rows shrinks the tile only to cover the real
    # multi-block code path at small test sizes.)
    cases = [
        (2, 8, None),   # N=16: packed path, single block
        (2, 7, None),   # N=14: fallback path, single exact block
        (4, 10, 8),     # N=40: packed path, grid=2 with partial last block
        (3, 7, 8),      # N=21: fallback path, grid=3 with partial last block
    ]

    ok = True
    for idx, (B, S, force) in enumerate(cases):
        ka, kb, kc = jax.random.split(jax.random.fold_in(key, idx + 1), 3)
        context = jax.random.normal(ka, (B, S, context_dim), jnp.float32)
        state = jax.random.normal(kb, (B, S, state_dim), jnp.float32)
        input_ = jax.random.normal(kc, (B, S, input_dim), jnp.float32)

        out = copy_linear(context, state, input_, v_c, v_s, v_i, b,
                          _force_tile_rows=force)
        out = jax.block_until_ready(out)

        ref = _reference(context, state, input_, v_c, v_s, v_i, b)
        assert out.shape == (B, S, 1)
        ok = ok and bool(jnp.allclose(out, ref, atol=1e-5, rtol=1e-5))

    assert ok
    print("KERNEL_OK")
</pallas_src>

<mosaic_0001>
module attributes {stable_mosaic.version = 11 : i64} {
  func.func @_copy_linear_kernel(%arg0: i32, %arg1: memref<1xf32, #tpu.memory_space<smem>>, %arg2: memref<4x128xf32, #tpu.memory_space<vmem>>, %arg3: memref<4x256xf32, #tpu.memory_space<vmem>>, %arg4: memref<4x128xf32, #tpu.memory_space<vmem>>, %arg5: memref<128x4xf32, #tpu.memory_space<vmem>>, %arg6: memref<256x4xf32, #tpu.memory_space<vmem>>, %arg7: memref<128x4xf32, #tpu.memory_space<vmem>>, %arg8: memref<4x4xf32, #tpu.memory_space<vmem>>) attributes {dimension_semantics = [#tpu.dimension_semantics<parallel>], iteration_bounds = array<i64: 1>, scalar_prefetch = 0 : i64, scratch_operands = 0 : i64, tpu.core_type = #tpu.core_type<tc>, window_params = [{transform_indices = @transform_0, window_bounds = array<i64: 1>}, {transform_indices = @transform_1, window_bounds = array<i64: 4, 128>}, {transform_indices = @transform_2, window_bounds = array<i64: 4, 256>}, {transform_indices = @transform_3, window_bounds = array<i64: 4, 128>}, {pipeline_mode = #tpu.pipeline_mode<synchronous>, transform_indices = @transform_4, window_bounds = array<i64: 128, 4>}, {pipeline_mode = #tpu.pipeline_mode<synchronous>, transform_indices = @transform_5, window_bounds = array<i64: 256, 4>}, {pipeline_mode = #tpu.pipeline_mode<synchronous>, transform_indices = @transform_6, window_bounds = array<i64: 128, 4>}, {transform_indices = @transform_7, window_bounds = array<i64: 4, 4>}]} {
    %c0 = arith.constant 0 : index
    %c0_0 = arith.constant 0 : index
    %0 = vector.load %arg2[%c0, %c0_0] : memref<4x128xf32, #tpu.memory_space<vmem>>, vector<4x128xf32>
    %c0_1 = arith.constant 0 : index
    %c0_2 = arith.constant 0 : index
    %1 = vector.load %arg5[%c0_1, %c0_2] : memref<128x4xf32, #tpu.memory_space<vmem>>, vector<128x4xf32>
    %cst = arith.constant dense<0.000000e+00> : vector<4x4xf32>
    %2 = tpu.matmul %0, %1, %cst {dimension_numbers = #tpu.dot_dimension_numbers<[1], [0], [0], [1], [0, 0, 1, 1], [], []>} : vector<4x128xf32>, vector<128x4xf32>, vector<4x4xf32> -> vector<4x4xf32>
    %c0_3 = arith.constant 0 : index
    %c0_4 = arith.constant 0 : index
    %3 = vector.load %arg3[%c0_3, %c0_4] : memref<4x256xf32, #tpu.memory_space<vmem>>, vector<4x256xf32>
    %c0_5 = arith.constant 0 : index
    %c0_6 = arith.constant 0 : index
    %4 = vector.load %arg6[%c0_5, %c0_6] : memref<256x4xf32, #tpu.memory_space<vmem>>, vector<256x4xf32>
    %cst_7 = arith.constant dense<0.000000e+00> : vector<4x4xf32>
    %5 = tpu.matmul %3, %4, %cst_7 {dimension_numbers = #tpu.dot_dimension_numbers<[1], [0], [0], [1], [0, 0, 1, 1], [], []>} : vector<4x256xf32>, vector<256x4xf32>, vector<4x4xf32> -> vector<4x4xf32>
    %6 = arith.addf %2, %5 : vector<4x4xf32>
    %c0_8 = arith.constant 0 : index
    %c0_9 = arith.constant 0 : index
    %7 = vector.load %arg4[%c0_8, %c0_9] : memref<4x128xf32, #tpu.memory_space<vmem>>, vector<4x128xf32>
    %c0_10 = arith.constant 0 : index
    %c0_11 = arith.constant 0 : index
    %8 = vector.load %arg7[%c0_10, %c0_11] : memref<128x4xf32, #tpu.memory_space<vmem>>, vector<128x4xf32>
    %cst_12 = arith.constant dense<0.000000e+00> : vector<4x4xf32>
    %9 = tpu.matmul %7, %8, %cst_12 {dimension_numbers = #tpu.dot_dimension_numbers<[1], [0], [0], [1], [0, 0, 1, 1], [], []>} : vector<4x128xf32>, vector<128x4xf32>, vector<4x4xf32> -> vector<4x4xf32>
    %10 = arith.addf %6, %9 : vector<4x4xf32>
    %c0_13 = arith.constant 0 : index
    %11 = memref.load %arg1[%c0_13] : memref<1xf32, #tpu.memory_space<smem>>
    %12 = vector.broadcast %11 : f32 to vector<4x4xf32>
    %13 = arith.addf %10, %12 : vector<4x4xf32>
    %c0_14 = arith.constant 0 : index
    %c0_15 = arith.constant 0 : index
    %14 = vector.load %arg8[%c0_14, %c0_15] : memref<4x4xf32, #tpu.memory_space<vmem>>, vector<4x4xf32>
    tpu.vector_store %arg8[%c0_14, %c0_15], %13 {strides = array<i32>} : memref<4x4xf32, #tpu.memory_space<vmem>>, vector<4x4xf32>,
    return
  }
  func.func @transform_0(%arg0: i32) -> i32 {
    %c0_i32 = arith.constant 0 : i32
    %c0_i32_0 = arith.constant 0 : i32
    return %c0_i32 : i32
  }
  func.func @transform_1(%arg0: i32) -> (i32, i32) {
    %c0_i32 = arith.constant 0 : i32
    %c0_i32_0 = arith.constant 0 : i32
    return %arg0, %c0_i32 : i32, i32
  }
  func.func @transform_2(%arg0: i32) -> (i32, i32) {
    %c0_i32 = arith.constant 0 : i32
    %c0_i32_0 = arith.constant 0 : i32
    return %arg0, %c0_i32 : i32, i32
  }
  func.func @transform_3(%arg0: i32) -> (i32, i32) {
    %c0_i32 = arith.constant 0 : i32
    %c0_i32_0 = arith.constant 0 : i32
    return %arg0, %c0_i32 : i32, i32
  }
  func.func @transform_4(%arg0: i32) -> (i32, i32) {
    %c0_i32 = arith.constant 0 : i32
    %c0_i32_0 = arith.constant 0 : i32
    %c0_i32_1 = arith.constant 0 : i32
    return %c0_i32, %c0_i32_0 : i32, i32
  }
  func.func @transform_5(%arg0: i32) -> (i32, i32) {
    %c0_i32 = arith.constant 0 : i32
    %c0_i32_0 = arith.constant 0 : i32
    %c0_i32_1 = arith.constant 0 : i32
    return %c0_i32, %c0_i32_0 : i32, i32
  }
  func.func @transform_6(%arg0: i32) -> (i32, i32) {
    %c0_i32 = arith.constant 0 : i32
    %c0_i32_0 = arith.constant 0 : i32
    %c0_i32_1 = arith.constant 0 : i32
    return %c0_i32, %c0_i32_0 : i32, i32
  }
  func.func @transform_7(%arg0: i32) -> (i32, i32) {
    %c0_i32 = arith.constant 0 : i32
    %c0_i32_0 = arith.constant 0 : i32
    return %arg0, %c0_i32 : i32, i32
  }
}

</mosaic_0001>

<llo_original>
// kernel: tpu_custom_call.1
$region0: #{tpu_custom_call.1}
  #allocation0 [shape = 'u32[]', space=smem, size = 0x4, offset = 0x4, fixed_abs, tag = 'smem constant byte address 0x4 - core index']
  #allocation1 [shape = 'u32[72,128]{1,0:T(1,128)}', space=vmem, size = 0x9000, scoped, tag = 'internal scratch']
  #allocation2 [shape = 'f32[1]{0:T(128)S(6)}', space=smem, size = 0x200, scoped, tag = 'scoped memory for tpu_custom_call.1']
  %s0 = inlined_call_operand.<no memory space> [shape: f32[1], index: 0, kind: input, shape index: {}]
  %s1 = inlined_call_operand.vmem [shape: f32[4,128], index: 1, kind: input, shape index: {}]
  %s2 = inlined_call_operand.vmem [shape: f32[4,256], index: 2, kind: input, shape index: {}]
  %s3 = inlined_call_operand.vmem [shape: f32[4,128], index: 3, kind: input, shape index: {}]
  %s4 = inlined_call_operand.vmem [shape: f32[128,4], index: 4, kind: input, shape index: {}]
  %s5 = inlined_call_operand.vmem [shape: f32[256,4], index: 5, kind: input, shape index: {}]
  %s6 = inlined_call_operand.vmem [shape: f32[128,4], index: 6, kind: input, shape index: {}]
  %s7 = inlined_call_operand.hbm [shape: f32[4,4], index: 7, kind: output, shape index: {}]
  %s8 = sld [smem:[#allocation0]]
  $region38: #{tpu_custom_call.1} parent=0
    _
  %s10 = ssub.s32 1, %s8
  %s11 = scalar_select 0, %s10, %s8
  %12 = sst [smem:[#allocation2]] %s0
  $region1: #{tpu_custom_call.1} parent=0
    #allocation3 [shape = 'u8[2048]{0}', space=vmem, size = 0x800, scoped, tag = 'output window, operand 0, single buffered']
    #allocation4 [shape = 's32[1]{0}', space=sflag, size = 0x4, scoped, tag = 'scoped memory for tpu_custom_call.1']
    %13 = vsyncpa [#allocation4], 0
    // Predicated region
    $region2: #{tpu_custom_call.1} parent=1 // pred_check
      _
    $region3: #{tpu_custom_call.1} parent=1 // pred_check_branch
      %15 = sbr.rel (0) target = $region5
    $region4: #{tpu_custom_call.1} parent=1 // pred_region
      _
    $region5: #{tpu_custom_call.1} parent=1 // pred_fallthru
      _
    // Predicated region
    $region6: #{tpu_custom_call.1} parent=1 // pred_check
      _
    $region7: #{tpu_custom_call.1} parent=1 // pred_check_branch
      %17 = sbr.rel (0) target = $region9
    $region8: #{tpu_custom_call.1} parent=1 // pred_region
      _
    $region9: #{tpu_custom_call.1} parent=1 // pred_fallthru
      _
    // Predicated region
    $region10: #{tpu_custom_call.1} parent=1 // pred_check
      _
    $region11: #{tpu_custom_call.1} parent=1 // pred_check_branch
      %19 = sbr.rel (0) target = $region13
    $region12: #{tpu_custom_call.1} parent=1 // pred_region
      _
    $region13: #{tpu_custom_call.1} parent=1 // pred_fallthru
      _
    // Predicated region
    $region14: #{tpu_custom_call.1} parent=1 // pred_check
      _
    $region15: #{tpu_custom_call.1} parent=1 // pred_check_branch
      %21 = sbr.rel (0) target = $region17
    $region16: #{tpu_custom_call.1} parent=1 // pred_region
      _
    $region17: #{tpu_custom_call.1} parent=1 // pred_fallthru
      _
    // Predicated region
    $region18: #{tpu_custom_call.1} parent=1 // pred_check
      _
    $region19: #{tpu_custom_call.1} parent=1 // pred_check_branch
      %23 = sbr.rel (0) target = $region21
    $region20: #{tpu_custom_call.1} parent=1 // pred_region
      _
    $region21: #{tpu_custom_call.1} parent=1 // pred_fallthru
      _
    // Predicated region
    $region22: #{tpu_custom_call.1} parent=1 // pred_check
      _
    $region23: #{tpu_custom_call.1} parent=1 // pred_check_branch
      %25 = sbr.rel (0) target = $region25
    $region24: #{tpu_custom_call.1} parent=1 // pred_region
      _
    $region25: #{tpu_custom_call.1} parent=1 // pred_fallthru
      _
    // Predicated region
    $region26: #{tpu_custom_call.1} parent=1 // pred_check
      _
    $region27: #{tpu_custom_call.1} parent=1 // pred_check_branch
      %27 = sbr.rel (0) target = $region29
    $region28: #{tpu_custom_call.1} parent=1 // pred_region
      _
    $region29: #{tpu_custom_call.1} parent=1 // pred_fallthru
      _
    %v28 = vld [vmem:[%s1] sm:$0xf]
    %v29 = vld [vmem:[%s4] sm:$0xff]
    %v30 = vld [vmem:[%s4 + $0x8] sm:$0xff]
    %v31 = vld [vmem:[%s4 + $0x10] sm:$0xff]
    %v32 = vld [vmem:[%s4 + $0x18] sm:$0xff]
    %v33 = vld [vmem:[%s4 + $0x20] sm:$0xff]
    %v34 = vld [vmem:[%s4 + $0x28] sm:$0xff]
    %v35 = vld [vmem:[%s4 + $0x30] sm:$0xff]
    %v36 = vld [vmem:[%s4 + $0x38] sm:$0xff]
    %v37 = vld [vmem:[%s4 + $0x40] sm:$0xff]
    %v38 = vld [vmem:[%s4 + $0x48] sm:$0xff]
    %v39 = vld [vmem:[%s4 + $0x50] sm:$0xff]
    %v40 = vld [vmem:[%s4 + $0x58] sm:$0xff]
    %v41 = vld [vmem:[%s4 + $0x60] sm:$0xff]
    %v42 = vld [vmem:[%s4 + $0x68] sm:$0xff]
    %v43 = vld [vmem:[%s4 + $0x70] sm:$0xff]
    %v44 = vld [vmem:[%s4 + $0x78] sm:$0xff]
    %v45 = vld [vmem:[%s2] sm:$0xff]
    %v46 = vld [vmem:[%s5] sm:$0xff]
    %v47 = vld [vmem:[%s5 + $0x8] sm:$0xff]
    %v48 = vld [vmem:[%s5 + $0x10] sm:$0xff]
    %v49 = vld [vmem:[%s5 + $0x18] sm:$0xff]
    %v50 = vld [vmem:[%s5 + $0x20] sm:$0xff]
    %v51 = vld [vmem:[%s5 + $0x28] sm:$0xff]
    %v52 = vld [vmem:[%s5 + $0x30] sm:$0xff]
    %v53 = vld [vmem:[%s5 + $0x38] sm:$0xff]
    %v54 = vld [vmem:[%s5 + $0x40] sm:$0xff]
    %v55 = vld [vmem:[%s5 + $0x48] sm:$0xff]
    %v56 = vld [vmem:[%s5 + $0x50] sm:$0xff]
    %v57 = vld [vmem:[%s5 + $0x58] sm:$0xff]
    %v58 = vld [vmem:[%s5 + $0x60] sm:$0xff]
    %v59 = vld [vmem:[%s5 + $0x68] sm:$0xff]
    %v60 = vld [vmem:[%s5 + $0x70] sm:$0xff]
    %v61 = vld [vmem:[%s5 + $0x78] sm:$0xff]
    %v62 = vld [vmem:[%s5 + $0x80] sm:$0xff]
    %v63 = vld [vmem:[%s5 + $0x88] sm:$0xff]
    %v64 = vld [vmem:[%s5 + $0x90] sm:$0xff]
    %v65 = vld [vmem:[%s5 + $0x98] sm:$0xff]
    %v66 = vld [vmem:[%s5 + $0xa0] sm:$0xff]
    %v67 = vld [vmem:[%s5 + $0xa8] sm:$0xff]
    %v68 = vld [vmem:[%s5 + $0xb0] sm:$0xff]
    %v69 = vld [vmem:[%s5 + $0xb8] sm:$0xff]
    %v70 = vld [vmem:[%s5 + $0xc0] sm:$0xff]
    %v71 = vld [vmem:[%s5 + $0xc8] sm:$0xff]
    %v72 = vld [vmem:[%s5 + $0xd0] sm:$0xff]
    %v73 = vld [vmem:[%s5 + $0xd8] sm:$0xff]
    %v74 = vld [vmem:[%s5 + $0xe0] sm:$0xff]
    %v75 = vld [vmem:[%s5 + $0xe8] sm:$0xff]
    %v76 = vld [vmem:[%s5 + $0xf0] sm:$0xff]
    %v77 = vld [vmem:[%s5 + $0xf8] sm:$0xff]
    %79 = vst [vmem:[#allocation1] ss:$2 sm:$0xff] %v45
    %v80 = vld.sshfl [vmem:[#allocation1] sm:$0xff pattern:$0x75316420]
    %v81 = vld.sshfl [vmem:[#allocation1 + $0x8] sm:$0xff pattern:$0x75316420]
    %84 = vmatpush.msra.mxu0 %v61
    %85 = vmatpush.msra.mxu0 %v60
    %86 = vmatpush.msra.mxu0 %v59
    %87 = vmatpush.msra.mxu0 %v58
    %88 = vmatpush.msra.mxu0 %v57
    %89 = vmatpush.msra.mxu0 %v56
    %90 = vmatpush.msra.mxu0 %v55
    %91 = vmatpush.msra.mxu0 %v54
    %92 = vmatpush.msra.mxu0 %v53
    %93 = vmatpush.msra.mxu0 %v52
    %94 = vmatpush.msra.mxu0 %v51
    %95 = vmatpush.msra.mxu0 %v50
    %96 = vmatpush.msra.mxu0 %v49
    %97 = vmatpush.msra.mxu0 %v48
    %98 = vmatpush.msra.mxu0 %v47
    %99 = vmatpush.msra.mxu0 %v46
    %100 = vmatmul.f32.gmra.mxu0 %v80
    %v101 = vpop.f32.mrf.mxu0
    %v102 = vadd.f32 0.0, %v101
    %103 = vdwg.mxu0
    %104 = vmatpush.msra.mxu0 %v77
    %105 = vmatpush.msra.mxu0 %v76
    %106 = vmatpush.msra.mxu0 %v75
    %107 = vmatpush.msra.mxu0 %v74
    %108 = vmatpush.msra.mxu0 %v73
    %109 = vmatpush.msra.mxu0 %v72
    %110 = vmatpush.msra.mxu0 %v71
    %111 = vmatpush.msra.mxu0 %v70
    %112 = vmatpush.msra.mxu0 %v69
    %113 = vmatpush.msra.mxu0 %v68
    %114 = vmatpush.msra.mxu0 %v67
    %115 = vmatpush.msra.mxu0 %v66
    %116 = vmatpush.msra.mxu0 %v65
    %117 = vmatpush.msra.mxu0 %v64
    %118 = vmatpush.msra.mxu0 %v63
    %119 = vmatpush.msra.mxu0 %v62
    %120 = vmatmul.f32.gmra.mxu0 %v81
    %v121 = vpop.f32.mrf.mxu0
    %v122 = vadd.f32 %v102, %v121
    %123 = vdwg.mxu0
    %124 = vmatpush.msra.mxu0 %v44
    %125 = vmatpush.msra.mxu0 %v43
    %126 = vmatpush.msra.mxu0 %v42
    %127 = vmatpush.msra.mxu0 %v41
    %128 = vmatpush.msra.mxu0 %v40
    %129 = vmatpush.msra.mxu0 %v39
    %130 = vmatpush.msra.mxu0 %v38
    %131 = vmatpush.msra.mxu0 %v37
    %132 = vmatpush.msra.mxu0 %v36
    %133 = vmatpush.msra.mxu0 %v35
    %134 = vmatpush.msra.mxu0 %v34
    %135 = vmatpush.msra.mxu0 %v33
    %136 = vmatpush.msra.mxu0 %v32
    %137 = vmatpush.msra.mxu0 %v31
    %138 = vmatpush.msra.mxu0 %v30
    %139 = vmatpush.msra.mxu0 %v29
    %140 = vmatmul.f32.gmra.mxu0 %v28
    %v141 = vpop.f32.mrf.mxu0
    %v142 = vadd.f32 %v122, %v141
    %143 = vdwg.mxu0
    %v144 = vld [vmem:[%s3] sm:$0xf]
    %v145 = vld [vmem:[%s6] sm:$0xff]
    %v146 = vld [vmem:[%s6 + $0x8] sm:$0xff]
    %v147 = vld [vmem:[%s6 + $0x10] sm:$0xff]
    %v148 = vld [vmem:[%s6 + $0x18] sm:$0xff]
    %v149 = vld [vmem:[%s6 + $0x20] sm:$0xff]
    %v150 = vld [vmem:[%s6 + $0x28] sm:$0xff]
    %v151 = vld [vmem:[%s6 + $0x30] sm:$0xff]
    %v152 = vld [vmem:[%s6 + $0x38] sm:$0xff]
    %v153 = vld [vmem:[%s6 + $0x40] sm:$0xff]
    %v154 = vld [vmem:[%s6 + $0x48] sm:$0xff]
    %v155 = vld [vmem:[%s6 + $0x50] sm:$0xff]
    %v156 = vld [vmem:[%s6 + $0x58] sm:$0xff]
    %v157 = vld [vmem:[%s6 + $0x60] sm:$0xff]
    %v158 = vld [vmem:[%s6 + $0x68] sm:$0xff]
    %v159 = vld [vmem:[%s6 + $0x70] sm:$0xff]
    %v160 = vld [vmem:[%s6 + $0x78] sm:$0xff]
    %161 = vmatpush.msra.mxu0 %v160
    %162 = vmatpush.msra.mxu0 %v159
    %163 = vmatpush.msra.mxu0 %v158
    %164 = vmatpush.msra.mxu0 %v157
    %165 = vmatpush.msra.mxu0 %v156
    %166 = vmatpush.msra.mxu0 %v155
    %167 = vmatpush.msra.mxu0 %v154
    %168 = vmatpush.msra.mxu0 %v153
    %169 = vmatpush.msra.mxu0 %v152
    %170 = vmatpush.msra.mxu0 %v151
    %171 = vmatpush.msra.mxu0 %v150
    %172 = vmatpush.msra.mxu0 %v149
    %173 = vmatpush.msra.mxu0 %v148
    %174 = vmatpush.msra.mxu0 %v147
    %175 = vmatpush.msra.mxu0 %v146
    %176 = vmatpush.msra.mxu0 %v145
    %177 = vmatmul.f32.gmra.mxu0 %v144
    %v178 = vpop.f32.mrf.mxu0
    %v179 = vadd.f32 0.0, %v178
    %180 = vdwg.mxu0
    %v181 = vadd.f32 %v142, %v179
    %s182 = sld [smem:[#allocation2]]
    %v183 = vstv %s182
    %v184 = vadd.f32 %v181, %v183
    %vm185 = vcmask 27648
    %186 = vst.msk [vmem:[#allocation3] sm:$0xf] %vm185, %v184
    // Predicated region
    $region30: #{tpu_custom_call.1} parent=1 // pred_check
      _
    $region31: #{tpu_custom_call.1} parent=1 // pred_check_branch
      %188 = sbr.rel (0) target = $region33
    $region32: #{tpu_custom_call.1} parent=1 // pred_region
      %190 = vsyncadd [#allocation4], 0
      %s192 = sshll.u32 [#allocation3], 4
      %s193 = int_to_ptr.vmem [resolvable:$true] %s192
      %s194 = sshll.u32 %s7, 4
      %s195 = int_to_ptr.hbm [resolvable:$true] %s194
      %197 = dma.vmem_to_hbm [thread:$0]  %s193, 64, %s195, [#allocation4]
    $region33: #{tpu_custom_call.1} parent=1 // pred_fallthru
      _
    // Predicated region
    $region34: #{tpu_custom_call.1} parent=1 // pred_check
      _
    $region35: #{tpu_custom_call.1} parent=1 // pred_check_branch
      %199 = sbr.rel (0) target = $region37
    $region36: #{tpu_custom_call.1} parent=1 // pred_region
      %201 = dma.done [#allocation4], 64
    $region37: #{tpu_custom_call.1} parent=1 // pred_fallthru
      _
    %202 = vsyncpa [#allocation4], 1

</llo_original>
